<compile_context>
chip_gen: v7x
topology: tpu7x:2x2x1
jax: 0.10.0
libtpu: 0.0.40
codegen_flags: <defaults>
</compile_context>

<pallas_src>
import math
import functools

import jax
import jax.numpy as jnp
from jax.experimental import pallas as pl
from jax.experimental.pallas import tpu as pltpu


def _attn_kernel(xq_ref, xkv_ref, mask_ref, wqkv_ref, bqkv_ref, wp_ref, bp_ref,
                 o_ref, *, n_head):
    # xq_ref : (1, Tq, C)  query-tile slice of x
    # xkv_ref: (1, T,  C)  full-sequence slice of x (for K/V)
    # mask_ref: (Tq, T)    additive bias, 0 where attended / -1e30 where masked
    # wqkv_ref: (C, 3C) bf16, bqkv_ref: (1, 3C) f32
    # wp_ref  : (C, C)  bf16, bp_ref  : (1, C)  f32
    Tq = xq_ref.shape[1]
    T = xkv_ref.shape[1]
    C = xq_ref.shape[2]
    D = C // n_head
    scale = 1.0 / math.sqrt(D)

    wqkv = wqkv_ref[...]          # (C, 3C) bf16
    bqkv = bqkv_ref[...]          # (1, 3C) f32

    if Tq == T:
        # Single query tile: one fused (T, C) @ (C, 3C) MXU matmul.
        x = xq_ref[0].astype(jnp.bfloat16)
        qkv = jnp.dot(x, wqkv, preferred_element_type=jnp.float32) + bqkv
        q = qkv[:, :C]
        k = qkv[:, C:2 * C]
        v = qkv[:, 2 * C:]
    else:
        # Q only for the query tile; K/V for the full sequence.
        xq = xq_ref[0].astype(jnp.bfloat16)
        xkv = xkv_ref[0].astype(jnp.bfloat16)
        q = jnp.dot(xq, wqkv[:, :C], preferred_element_type=jnp.float32) \
            + bqkv[:, :C]
        kv = jnp.dot(xkv, wqkv[:, C:], preferred_element_type=jnp.float32) \
            + bqkv[:, C:]
        k = kv[:, :C]
        v = kv[:, C:]

    bias = mask_ref[...]          # (Tq, T) f32 additive mask

    # Per-head attention via lane slices (no 3-D transposes).
    y_parts = []
    for h in range(n_head):
        lo, hi = h * D, (h + 1) * D
        q_h = q[:, lo:hi].astype(jnp.bfloat16)   # (Tq, D)
        k_h = k[:, lo:hi].astype(jnp.bfloat16)   # (T,  D)
        v_h = v[:, lo:hi].astype(jnp.bfloat16)   # (T,  D)

        # (Tq, D) x (T, D) contracting D -> (Tq, T); no explicit k transpose.
        s = jax.lax.dot_general(q_h, k_h, (((1,), (1,)), ((), ())),
                                preferred_element_type=jnp.float32)
        s = s * scale + bias

        # Numerically-stable softmax; divide replaced by EUP reciprocal.
        m = jnp.max(s, axis=-1, keepdims=True)
        e = jnp.exp(s - m)
        denom = jnp.sum(e, axis=-1, keepdims=True)
        p = (e * pl.reciprocal(denom, approx=True)).astype(jnp.bfloat16)

        # (attn_drop: identity in eval mode)
        y_parts.append(jnp.dot(p, v_h, preferred_element_type=jnp.float32))

    y = jnp.concatenate(y_parts, axis=-1).astype(jnp.bfloat16)   # (Tq, C)

    # Output projection (resid_drop: identity in eval mode).
    out = jnp.dot(y, wp_ref[...], preferred_element_type=jnp.float32) \
        + bp_ref[...]
    o_ref[0] = out.astype(o_ref.dtype)


def causal_cross_cond_self_attention(x, params, *, n_head, n_modality,
                                     q_tile=None):
    B, T, C = x.shape
    assert C % n_head == 0 and T % n_modality == 0
    t = T // n_modality

    # Query-tile size: full T for small sequences, else 256-wide tiles.
    if q_tile is None:
        q_tile = T if T <= 256 else 256
    if T % q_tile != 0 or q_tile % 8 != 0:
        q_tile = T
    n_q = T // q_tile

    # Hoisted additive causal/modality mask: mask[i, j] = (i % t) >= (j % t).
    row = jnp.arange(T)[:, None] % t
    col = jnp.arange(T)[None, :] % t
    mask_bias = jnp.where(row >= col, 0.0, -1e30).astype(jnp.float32)  # (T, T)

    # Fused QKV weights/biases; weights in bf16 for the MXU (f32 accumulate).
    wqkv = jnp.concatenate([params["wq"], params["wk"], params["wv"]],
                           axis=1).astype(jnp.bfloat16)          # (C, 3C)
    bqkv = jnp.concatenate([params["bq"], params["bk"], params["bv"]],
                           axis=1).astype(jnp.float32)           # (1, 3C)
    wp = params["wp"].astype(jnp.bfloat16)                       # (C, C)
    bp = params["bp"].astype(jnp.float32)                        # (1, C)

    kernel = functools.partial(_attn_kernel, n_head=n_head)

    xq_spec = pl.BlockSpec((1, q_tile, C), lambda b, qi: (b, qi, 0))
    xkv_spec = pl.BlockSpec((1, T, C), lambda b, qi: (b, 0, 0))
    mask_spec = pl.BlockSpec((q_tile, T), lambda b, qi: (qi, 0))
    wqkv_spec = pl.BlockSpec((C, 3 * C), lambda b, qi: (0, 0))
    bqkv_spec = pl.BlockSpec((1, 3 * C), lambda b, qi: (0, 0))
    wp_spec = pl.BlockSpec((C, C), lambda b, qi: (0, 0))
    bp_spec = pl.BlockSpec((1, C), lambda b, qi: (0, 0))
    out_spec = pl.BlockSpec((1, q_tile, C), lambda b, qi: (b, qi, 0))

    D = C // n_head
    flops = (2 * B * T * C * 3 * C          # QKV projection
             + 4 * B * n_head * T * T * D   # QK^T + PV
             + 2 * B * T * C * C)           # output projection
    bytes_accessed = (2 * x.size * x.dtype.itemsize          # x read + out
                      + wqkv.size * 2 + wp.size * 2          # bf16 weights
                      + (bqkv.size + bp.size) * 4
                      + mask_bias.size * 4)
    cost = pl.CostEstimate(flops=flops,
                           transcendentals=B * n_head * T * T,
                           bytes_accessed=bytes_accessed)

    return pl.pallas_call(
        kernel,
        out_shape=jax.ShapeDtypeStruct((B, T, C), x.dtype),
        grid=(B, n_q),
        in_specs=[xq_spec, xkv_spec, mask_spec,
                  wqkv_spec, bqkv_spec, wp_spec, bp_spec],
        out_specs=out_spec,
        compiler_params=pltpu.CompilerParams(
            dimension_semantics=("parallel", "parallel"),
            vmem_limit_bytes=32 * 1024 * 1024),
        cost_estimate=cost,
    )(x, x, mask_bias, wqkv, bqkv, wp, bp)


def _reference(x, params, *, n_head, n_modality):
    """Pure-JAX f32 reference mirroring the PyTorch forward (eval mode)."""
    B, T, C = x.shape
    D = C // n_head
    t = T // n_modality

    def lin(x, w, b):
        return x @ w + b[0]

    q = lin(x, params["wq"], params["bq"]).reshape(B, T, n_head, D).transpose(0, 2, 1, 3)
    k = lin(x, params["wk"], params["bk"]).reshape(B, T, n_head, D).transpose(0, 2, 1, 3)
    v = lin(x, params["wv"], params["bv"]).reshape(B, T, n_head, D).transpose(0, 2, 1, 3)

    att = jnp.einsum('bhtd,bhsd->bhts', q, k) / math.sqrt(D)
    row = jnp.arange(T)[:, None] % t
    col = jnp.arange(T)[None, :] % t
    mask = row >= col
    att = jnp.where(mask[None, None], att, -jnp.inf)
    att = jax.nn.softmax(att, axis=-1)
    y = jnp.einsum('bhts,bhsd->bhtd', att, v)
    y = y.transpose(0, 2, 1, 3).reshape(B, T, C)
    return lin(y, params["wp"], params["bp"])


if __name__ == "__main__":
    # config: n_embd=32, n_head=4, n_modality=2, T=8 (t=4 per modality)
    B, T, C = 2, 8, 32
    n_head, n_modality = 4, 2

    key = jax.random.PRNGKey(0)
    keys = jax.random.split(key, 10)
    scale = 1.0 / math.sqrt(C)
    params = {
        "wq": jax.random.uniform(keys[0], (C, C), jnp.float32, -scale, scale),
        "wk": jax.random.uniform(keys[1], (C, C), jnp.float32, -scale, scale),
        "wv": jax.random.uniform(keys[2], (C, C), jnp.float32, -scale, scale),
        "wp": jax.random.uniform(keys[3], (C, C), jnp.float32, -scale, scale),
        "bq": jax.random.uniform(keys[4], (1, C), jnp.float32, -scale, scale),
        "bk": jax.random.uniform(keys[5], (1, C), jnp.float32, -scale, scale),
        "bv": jax.random.uniform(keys[6], (1, C), jnp.float32, -scale, scale),
        "bp": jax.random.uniform(keys[7], (1, C), jnp.float32, -scale, scale),
    }
    x = jax.random.normal(keys[8], (B, T, C), jnp.float32)

    out = causal_cross_cond_self_attention(x, params, n_head=n_head,
                                            n_modality=n_modality)
    out = jax.block_until_ready(out)

    ref = _reference(x, params, n_head=n_head, n_modality=n_modality)
    assert out.shape == (B, T, C)
    max_err = float(jnp.max(jnp.abs(out - ref)))
    # bf16 MXU operands (f32 accumulate) -> relaxed tolerance vs f32 reference.
    assert jnp.allclose(out, ref, rtol=5e-2, atol=5e-2), \
        f"mismatch vs reference (max abs err {max_err})"

    print("KERNEL_OK")
</pallas_src>

<mosaic_0001>
module attributes {stable_mosaic.version = 11 : i64} {
  func.func @_attn_kernel(%arg0: i32, %arg1: i32, %arg2: memref<1x8x32xf32, #tpu.memory_space<vmem>>, %arg3: memref<1x8x32xf32, #tpu.memory_space<vmem>>, %arg4: memref<8x8xf32, #tpu.memory_space<vmem>>, %arg5: memref<32x96xbf16, #tpu.memory_space<vmem>>, %arg6: memref<1x96xf32, #tpu.memory_space<vmem>>, %arg7: memref<32x32xbf16, #tpu.memory_space<vmem>>, %arg8: memref<1x32xf32, #tpu.memory_space<vmem>>, %arg9: memref<1x8x32xf32, #tpu.memory_space<vmem>>) attributes {dimension_semantics = [#tpu.dimension_semantics<parallel>, #tpu.dimension_semantics<parallel>], iteration_bounds = array<i64: 2, 1>, scalar_prefetch = 0 : i64, scratch_operands = 0 : i64, tpu.core_type = #tpu.core_type<tc>, window_params = [{transform_indices = @transform_0, window_bounds = array<i64: 1, 8, 32>}, {transform_indices = @transform_1, window_bounds = array<i64: 1, 8, 32>}, {transform_indices = @transform_2, window_bounds = array<i64: 8, 8>}, {pipeline_mode = #tpu.pipeline_mode<synchronous>, transform_indices = @transform_3, window_bounds = array<i64: 32, 96>}, {pipeline_mode = #tpu.pipeline_mode<synchronous>, transform_indices = @transform_4, window_bounds = array<i64: 1, 96>}, {pipeline_mode = #tpu.pipeline_mode<synchronous>, transform_indices = @transform_5, window_bounds = array<i64: 32, 32>}, {pipeline_mode = #tpu.pipeline_mode<synchronous>, transform_indices = @transform_6, window_bounds = array<i64: 1, 32>}, {transform_indices = @transform_7, window_bounds = array<i64: 1, 8, 32>}]} {
    %c0 = arith.constant 0 : index
    %c0_0 = arith.constant 0 : index
    %0 = vector.load %arg5[%c0, %c0_0] : memref<32x96xbf16, #tpu.memory_space<vmem>>, vector<32x96xbf16>
    %c0_1 = arith.constant 0 : index
    %c0_2 = arith.constant 0 : index
    %1 = vector.load %arg6[%c0_1, %c0_2] : memref<1x96xf32, #tpu.memory_space<vmem>>, vector<1x96xf32>
    %c0_3 = arith.constant 0 : index
    %c0_4 = arith.constant 0 : index
    %c0_5 = arith.constant 0 : index
    %2 = vector.load %arg2[%c0_3, %c0_4, %c0_5] : memref<1x8x32xf32, #tpu.memory_space<vmem>>, vector<1x8x32xf32>
    %3 = vector.shape_cast %2 : vector<1x8x32xf32> to vector<8x32xf32>
    %4 = arith.truncf %3 : vector<8x32xf32> to vector<8x32xbf16>
    %cst = arith.constant dense<0.000000e+00> : vector<8x96xf32>
    %5 = tpu.matmul %4, %0, %cst {dimension_numbers = #tpu.dot_dimension_numbers<[1], [0], [0], [1], [0, 0, 1, 1], [], []>} : vector<8x32xbf16>, vector<32x96xbf16>, vector<8x96xf32> -> vector<8x96xf32>
    %6 = vector.broadcast %1 : vector<1x96xf32> to vector<8x96xf32>
    %7 = arith.addf %5, %6 : vector<8x96xf32>
    %8 = vector.extract_strided_slice %7 {offsets = [0, 0], sizes = [8, 32], strides = [1, 1]} : vector<8x96xf32> to vector<8x32xf32>
    %9 = vector.extract_strided_slice %7 {offsets = [0, 32], sizes = [8, 32], strides = [1, 1]} : vector<8x96xf32> to vector<8x32xf32>
    %10 = vector.extract_strided_slice %7 {offsets = [0, 64], sizes = [8, 32], strides = [1, 1]} : vector<8x96xf32> to vector<8x32xf32>
    %c0_6 = arith.constant 0 : index
    %c0_7 = arith.constant 0 : index
    %11 = vector.load %arg4[%c0_6, %c0_7] : memref<8x8xf32, #tpu.memory_space<vmem>>, vector<8x8xf32>
    %12 = vector.extract_strided_slice %8 {offsets = [0, 0], sizes = [8, 8], strides = [1, 1]} : vector<8x32xf32> to vector<8x8xf32>
    %13 = arith.truncf %12 : vector<8x8xf32> to vector<8x8xbf16>
    %14 = vector.extract_strided_slice %9 {offsets = [0, 0], sizes = [8, 8], strides = [1, 1]} : vector<8x32xf32> to vector<8x8xf32>
    %15 = arith.truncf %14 : vector<8x8xf32> to vector<8x8xbf16>
    %16 = vector.extract_strided_slice %10 {offsets = [0, 0], sizes = [8, 8], strides = [1, 1]} : vector<8x32xf32> to vector<8x8xf32>
    %17 = arith.truncf %16 : vector<8x8xf32> to vector<8x8xbf16>
    %cst_8 = arith.constant dense<0.000000e+00> : vector<8x8xf32>
    %18 = tpu.matmul %13, %15, %cst_8 {dimension_numbers = #tpu.dot_dimension_numbers<[1], [1], [0], [0], [0, 0, 1, 0], [], []>} : vector<8x8xbf16>, vector<8x8xbf16>, vector<8x8xf32> -> vector<8x8xf32>
    %cst_9 = arith.constant 0.353553385 : f32
    %19 = vector.broadcast %cst_9 : f32 to vector<8x8xf32>
    %20 = arith.mulf %18, %19 : vector<8x8xf32>
    %21 = arith.addf %20, %11 : vector<8x8xf32>
    %cst_10 = arith.constant dense<0xFF800000> : vector<8xf32>
    %22 = vector.multi_reduction <maximumf>, %21, %cst_10 [1] : vector<8x8xf32> to vector<8xf32>
    %23 = vector.shape_cast %22 : vector<8xf32> to vector<8x1xf32>
    %24 = vector.broadcast %23 : vector<8x1xf32> to vector<8x8xf32>
    %25 = arith.subf %21, %24 : vector<8x8xf32>
    %26 = math.exp %25 : vector<8x8xf32>
    %cst_11 = arith.constant dense<0.000000e+00> : vector<8xf32>
    %27 = vector.multi_reduction <add>, %26, %cst_11 [1] : vector<8x8xf32> to vector<8xf32>
    %28 = vector.shape_cast %27 : vector<8xf32> to vector<8x1xf32>
    %29 = tpu.reciprocal %28 {approx = true} : vector<8x1xf32> -> vector<8x1xf32>
    %30 = vector.broadcast %29 : vector<8x1xf32> to vector<8x8xf32>
    %31 = arith.mulf %26, %30 : vector<8x8xf32>
    %32 = arith.truncf %31 : vector<8x8xf32> to vector<8x8xbf16>
    %cst_12 = arith.constant dense<0.000000e+00> : vector<8x8xf32>
    %33 = tpu.matmul %32, %17, %cst_12 {dimension_numbers = #tpu.dot_dimension_numbers<[1], [0], [0], [1], [0, 0, 1, 1], [], []>} : vector<8x8xbf16>, vector<8x8xbf16>, vector<8x8xf32> -> vector<8x8xf32>
    %34 = vector.extract_strided_slice %8 {offsets = [0, 8], sizes = [8, 8], strides = [1, 1]} : vector<8x32xf32> to vector<8x8xf32>
    %35 = arith.truncf %34 : vector<8x8xf32> to vector<8x8xbf16>
    %36 = vector.extract_strided_slice %9 {offsets = [0, 8], sizes = [8, 8], strides = [1, 1]} : vector<8x32xf32> to vector<8x8xf32>
    %37 = arith.truncf %36 : vector<8x8xf32> to vector<8x8xbf16>
    %38 = vector.extract_strided_slice %10 {offsets = [0, 8], sizes = [8, 8], strides = [1, 1]} : vector<8x32xf32> to vector<8x8xf32>
    %39 = arith.truncf %38 : vector<8x8xf32> to vector<8x8xbf16>
    %cst_13 = arith.constant dense<0.000000e+00> : vector<8x8xf32>
    %40 = tpu.matmul %35, %37, %cst_13 {dimension_numbers = #tpu.dot_dimension_numbers<[1], [1], [0], [0], [0, 0, 1, 0], [], []>} : vector<8x8xbf16>, vector<8x8xbf16>, vector<8x8xf32> -> vector<8x8xf32>
    %cst_14 = arith.constant 0.353553385 : f32
    %41 = vector.broadcast %cst_14 : f32 to vector<8x8xf32>
    %42 = arith.mulf %40, %41 : vector<8x8xf32>
    %43 = arith.addf %42, %11 : vector<8x8xf32>
    %cst_15 = arith.constant dense<0xFF800000> : vector<8xf32>
    %44 = vector.multi_reduction <maximumf>, %43, %cst_15 [1] : vector<8x8xf32> to vector<8xf32>
    %45 = vector.shape_cast %44 : vector<8xf32> to vector<8x1xf32>
    %46 = vector.broadcast %45 : vector<8x1xf32> to vector<8x8xf32>
    %47 = arith.subf %43, %46 : vector<8x8xf32>
    %48 = math.exp %47 : vector<8x8xf32>
    %cst_16 = arith.constant dense<0.000000e+00> : vector<8xf32>
    %49 = vector.multi_reduction <add>, %48, %cst_16 [1] : vector<8x8xf32> to vector<8xf32>
    %50 = vector.shape_cast %49 : vector<8xf32> to vector<8x1xf32>
    %51 = tpu.reciprocal %50 {approx = true} : vector<8x1xf32> -> vector<8x1xf32>
    %52 = vector.broadcast %51 : vector<8x1xf32> to vector<8x8xf32>
    %53 = arith.mulf %48, %52 : vector<8x8xf32>
    %54 = arith.truncf %53 : vector<8x8xf32> to vector<8x8xbf16>
    %cst_17 = arith.constant dense<0.000000e+00> : vector<8x8xf32>
    %55 = tpu.matmul %54, %39, %cst_17 {dimension_numbers = #tpu.dot_dimension_numbers<[1], [0], [0], [1], [0, 0, 1, 1], [], []>} : vector<8x8xbf16>, vector<8x8xbf16>, vector<8x8xf32> -> vector<8x8xf32>
    %56 = vector.extract_strided_slice %8 {offsets = [0, 16], sizes = [8, 8], strides = [1, 1]} : vector<8x32xf32> to vector<8x8xf32>
    %57 = arith.truncf %56 : vector<8x8xf32> to vector<8x8xbf16>
    %58 = vector.extract_strided_slice %9 {offsets = [0, 16], sizes = [8, 8], strides = [1, 1]} : vector<8x32xf32> to vector<8x8xf32>
    %59 = arith.truncf %58 : vector<8x8xf32> to vector<8x8xbf16>
    %60 = vector.extract_strided_slice %10 {offsets = [0, 16], sizes = [8, 8], strides = [1, 1]} : vector<8x32xf32> to vector<8x8xf32>
    %61 = arith.truncf %60 : vector<8x8xf32> to vector<8x8xbf16>
    %cst_18 = arith.constant dense<0.000000e+00> : vector<8x8xf32>
    %62 = tpu.matmul %57, %59, %cst_18 {dimension_numbers = #tpu.dot_dimension_numbers<[1], [1], [0], [0], [0, 0, 1, 0], [], []>} : vector<8x8xbf16>, vector<8x8xbf16>, vector<8x8xf32> -> vector<8x8xf32>
    %cst_19 = arith.constant 0.353553385 : f32
    %63 = vector.broadcast %cst_19 : f32 to vector<8x8xf32>
    %64 = arith.mulf %62, %63 : vector<8x8xf32>
    %65 = arith.addf %64, %11 : vector<8x8xf32>
    %cst_20 = arith.constant dense<0xFF800000> : vector<8xf32>
    %66 = vector.multi_reduction <maximumf>, %65, %cst_20 [1] : vector<8x8xf32> to vector<8xf32>
    %67 = vector.shape_cast %66 : vector<8xf32> to vector<8x1xf32>
    %68 = vector.broadcast %67 : vector<8x1xf32> to vector<8x8xf32>
    %69 = arith.subf %65, %68 : vector<8x8xf32>
    %70 = math.exp %69 : vector<8x8xf32>
    %cst_21 = arith.constant dense<0.000000e+00> : vector<8xf32>
    %71 = vector.multi_reduction <add>, %70, %cst_21 [1] : vector<8x8xf32> to vector<8xf32>
    %72 = vector.shape_cast %71 : vector<8xf32> to vector<8x1xf32>
    %73 = tpu.reciprocal %72 {approx = true} : vector<8x1xf32> -> vector<8x1xf32>
    %74 = vector.broadcast %73 : vector<8x1xf32> to vector<8x8xf32>
    %75 = arith.mulf %70, %74 : vector<8x8xf32>
    %76 = arith.truncf %75 : vector<8x8xf32> to vector<8x8xbf16>
    %cst_22 = arith.constant dense<0.000000e+00> : vector<8x8xf32>
    %77 = tpu.matmul %76, %61, %cst_22 {dimension_numbers = #tpu.dot_dimension_numbers<[1], [0], [0], [1], [0, 0, 1, 1], [], []>} : vector<8x8xbf16>, vector<8x8xbf16>, vector<8x8xf32> -> vector<8x8xf32>
    %78 = vector.extract_strided_slice %8 {offsets = [0, 24], sizes = [8, 8], strides = [1, 1]} : vector<8x32xf32> to vector<8x8xf32>
    %79 = arith.truncf %78 : vector<8x8xf32> to vector<8x8xbf16>
    %80 = vector.extract_strided_slice %9 {offsets = [0, 24], sizes = [8, 8], strides = [1, 1]} : vector<8x32xf32> to vector<8x8xf32>
    %81 = arith.truncf %80 : vector<8x8xf32> to vector<8x8xbf16>
    %82 = vector.extract_strided_slice %10 {offsets = [0, 24], sizes = [8, 8], strides = [1, 1]} : vector<8x32xf32> to vector<8x8xf32>
    %83 = arith.truncf %82 : vector<8x8xf32> to vector<8x8xbf16>
    %cst_23 = arith.constant dense<0.000000e+00> : vector<8x8xf32>
    %84 = tpu.matmul %79, %81, %cst_23 {dimension_numbers = #tpu.dot_dimension_numbers<[1], [1], [0], [0], [0, 0, 1, 0], [], []>} : vector<8x8xbf16>, vector<8x8xbf16>, vector<8x8xf32> -> vector<8x8xf32>
    %cst_24 = arith.constant 0.353553385 : f32
    %85 = vector.broadcast %cst_24 : f32 to vector<8x8xf32>
    %86 = arith.mulf %84, %85 : vector<8x8xf32>
    %87 = arith.addf %86, %11 : vector<8x8xf32>
    %cst_25 = arith.constant dense<0xFF800000> : vector<8xf32>
    %88 = vector.multi_reduction <maximumf>, %87, %cst_25 [1] : vector<8x8xf32> to vector<8xf32>
    %89 = vector.shape_cast %88 : vector<8xf32> to vector<8x1xf32>
    %90 = vector.broadcast %89 : vector<8x1xf32> to vector<8x8xf32>
    %91 = arith.subf %87, %90 : vector<8x8xf32>
    %92 = math.exp %91 : vector<8x8xf32>
    %cst_26 = arith.constant dense<0.000000e+00> : vector<8xf32>
    %93 = vector.multi_reduction <add>, %92, %cst_26 [1] : vector<8x8xf32> to vector<8xf32>
    %94 = vector.shape_cast %93 : vector<8xf32> to vector<8x1xf32>
    %95 = tpu.reciprocal %94 {approx = true} : vector<8x1xf32> -> vector<8x1xf32>
    %96 = vector.broadcast %95 : vector<8x1xf32> to vector<8x8xf32>
    %97 = arith.mulf %92, %96 : vector<8x8xf32>
    %98 = arith.truncf %97 : vector<8x8xf32> to vector<8x8xbf16>
    %cst_27 = arith.constant dense<0.000000e+00> : vector<8x8xf32>
    %99 = tpu.matmul %98, %83, %cst_27 {dimension_numbers = #tpu.dot_dimension_numbers<[1], [0], [0], [1], [0, 0, 1, 1], [], []>} : vector<8x8xbf16>, vector<8x8xbf16>, vector<8x8xf32> -> vector<8x8xf32>
    %100 = tpu.concatenate %33, %55, %77, %99 in 1 : vector<8x8xf32>, vector<8x8xf32>, vector<8x8xf32>, vector<8x8xf32> -> vector<8x32xf32>
    %101 = arith.truncf %100 : vector<8x32xf32> to vector<8x32xbf16>
    %c0_28 = arith.constant 0 : index
    %c0_29 = arith.constant 0 : index
    %102 = vector.load %arg7[%c0_28, %c0_29] : memref<32x32xbf16, #tpu.memory_space<vmem>>, vector<32x32xbf16>
    %cst_30 = arith.constant dense<0.000000e+00> : vector<8x32xf32>
    %103 = tpu.matmul %101, %102, %cst_30 {dimension_numbers = #tpu.dot_dimension_numbers<[1], [0], [0], [1], [0, 0, 1, 1], [], []>} : vector<8x32xbf16>, vector<32x32xbf16>, vector<8x32xf32> -> vector<8x32xf32>
    %c0_31 = arith.constant 0 : index
    %c0_32 = arith.constant 0 : index
    %104 = vector.load %arg8[%c0_31, %c0_32] : memref<1x32xf32, #tpu.memory_space<vmem>>, vector<1x32xf32>
    %105 = vector.broadcast %104 : vector<1x32xf32> to vector<8x32xf32>
    %106 = arith.addf %103, %105 : vector<8x32xf32>
    %c0_33 = arith.constant 0 : index
    %c0_34 = arith.constant 0 : index
    %c0_35 = arith.constant 0 : index
    %107 = vector.load %arg9[%c0_33, %c0_34, %c0_35] : memref<1x8x32xf32, #tpu.memory_space<vmem>>, vector<1x8x32xf32>
    %108 = vector.shape_cast %107 : vector<1x8x32xf32> to vector<8x32xf32>
    %109 = vector.shape_cast %106 : vector<8x32xf32> to vector<1x8x32xf32>
    tpu.vector_store %arg9[%c0_33, %c0_34, %c0_35], %109 {strides = array<i32>} : memref<1x8x32xf32, #tpu.memory_space<vmem>>, vector<1x8x32xf32>,
    return
  }
  func.func @transform_0(%arg0: i32, %arg1: i32) -> (i32, i32, i32) {
    %c0_i32 = arith.constant 0 : i32
    %c0_i32_0 = arith.constant 0 : i32
    return %arg0, %arg1, %c0_i32 : i32, i32, i32
  }
  func.func @transform_1(%arg0: i32, %arg1: i32) -> (i32, i32, i32) {
    %c0_i32 = arith.constant 0 : i32
    %c0_i32_0 = arith.constant 0 : i32
    %c0_i32_1 = arith.constant 0 : i32
    return %arg0, %c0_i32, %c0_i32_0 : i32, i32, i32
  }
  func.func @transform_2(%arg0: i32, %arg1: i32) -> (i32, i32) {
    %c0_i32 = arith.constant 0 : i32
    %c0_i32_0 = arith.constant 0 : i32
    return %arg1, %c0_i32 : i32, i32
  }
  func.func @transform_3(%arg0: i32, %arg1: i32) -> (i32, i32) {
    %c0_i32 = arith.constant 0 : i32
    %c0_i32_0 = arith.constant 0 : i32
    %c0_i32_1 = arith.constant 0 : i32
    return %c0_i32, %c0_i32_0 : i32, i32
  }
  func.func @transform_4(%arg0: i32, %arg1: i32) -> (i32, i32) {
    %c0_i32 = arith.constant 0 : i32
    %c0_i32_0 = arith.constant 0 : i32
    %c0_i32_1 = arith.constant 0 : i32
    return %c0_i32, %c0_i32_0 : i32, i32
  }
  func.func @transform_5(%arg0: i32, %arg1: i32) -> (i32, i32) {
    %c0_i32 = arith.constant 0 : i32
    %c0_i32_0 = arith.constant 0 : i32
    %c0_i32_1 = arith.constant 0 : i32
    return %c0_i32, %c0_i32_0 : i32, i32
  }
  func.func @transform_6(%arg0: i32, %arg1: i32) -> (i32, i32) {
    %c0_i32 = arith.constant 0 : i32
    %c0_i32_0 = arith.constant 0 : i32
    %c0_i32_1 = arith.constant 0 : i32
    return %c0_i32, %c0_i32_0 : i32, i32
  }
  func.func @transform_7(%arg0: i32, %arg1: i32) -> (i32, i32, i32) {
    %c0_i32 = arith.constant 0 : i32
    %c0_i32_0 = arith.constant 0 : i32
    return %arg0, %arg1, %c0_i32 : i32, i32, i32
  }
}

</mosaic_0001>

<llo_original>
// kernel: tpu_custom_call.1
$region0: #{tpu_custom_call.1}
  #allocation0 [shape = 'u32[]', space=smem, size = 0x4, offset = 0x4, fixed_abs, tag = 'smem constant byte address 0x4 - core index']
  #allocation1 [shape = 'u32[144,128]{1,0:T(1,128)}', space=vmem, size = 0x12000, scoped, tag = 'internal scratch']
  %s0 = inlined_call_operand.hbm [shape: f32[2,8,32], index: 0, kind: input, shape index: {}]
  %s1 = inlined_call_operand.hbm [shape: f32[2,8,32], index: 1, kind: input, shape index: {}]
  %s2 = inlined_call_operand.hbm [shape: f32[8,8], index: 2, kind: input, shape index: {}]
  %s3 = inlined_call_operand.hbm [shape: bf16[32,96], index: 3, kind: input, shape index: {}]
  %s4 = inlined_call_operand.vmem [shape: f32[1,96], index: 4, kind: input, shape index: {}]
  %s5 = inlined_call_operand.vmem [shape: bf16[32,32], index: 5, kind: input, shape index: {}]
  %s6 = inlined_call_operand.vmem [shape: f32[1,32], index: 6, kind: input, shape index: {}]
  %s7 = inlined_call_operand.hbm [shape: f32[2,8,32], index: 7, kind: output, shape index: {}]
  %s8 = sld [smem:[#allocation0]]
  $region77: #{tpu_custom_call.1} parent=0
    _
  %s10 = ssub.s32 1, %s8
  %s11 = scalar_select 0, %s10, %s8
  $region1: #{tpu_custom_call.1} parent=0
    #allocation2 [shape = 'u8[8192]{0}', space=vmem, size = 0x2000, scoped, tag = 'input window, operand 0']
    #allocation3 [shape = 's32[2]{0}', space=sflag, size = 0x8, scoped, tag = 'scoped memory for tpu_custom_call.1']
    #allocation4 [shape = 's32[2]{0}', space=sflag, size = 0x8, scoped, tag = 'scoped memory for tpu_custom_call.1']
    #allocation5 [shape = 'u8[8192]{0}', space=vmem, size = 0x2000, scoped, tag = 'input window, operand 1']
    #allocation6 [shape = 's32[2]{0}', space=sflag, size = 0x8, scoped, tag = 'scoped memory for tpu_custom_call.1']
    #allocation7 [shape = 'u8[4096]{0}', space=vmem, size = 0x1000, scoped, tag = 'input window, operand 2, single buffered']
    #allocation8 [shape = 'u8[8192]{0}', space=vmem, size = 0x2000, scoped, tag = 'input window, operand 3, single buffered']
    #allocation9 [shape = 's32[1]{0}', space=sflag, size = 0x4, scoped, tag = 'scoped memory for tpu_custom_call.1']
    #allocation10 [shape = 'u8[8192]{0}', space=vmem, size = 0x2000, scoped, tag = 'output window, operand 0']
    %12 = vsyncpa [#allocation3], 0
    %s13 = scalar_lea.sflag [#allocation3], 1
    %14 = vsyncpa %s13, 0
    %15 = vsyncpa [#allocation6], 0
    %s16 = scalar_lea.sflag [#allocation6], 1
    %17 = vsyncpa %s16, 0
    %18 = vsyncpa [#allocation9], 0
    %19 = vsyncpa [#allocation4], 0
    %s20 = scalar_lea.sflag [#allocation4], 1
    %21 = vsyncpa %s20, 0
    loop: start=0, step=1, limit=4
    $region2: #{tpu_custom_call.1} parent=1 // loop_pre_header
      _
    $region3: #{tpu_custom_call.1} parent=1 // loop_header
      %s23 = sphi 0, %s27
      %p24 = scmp.ge.s32.totalorder %s23, 4
      %s30 = sphi 0, %s42
      %s31 = sphi 0, %s38
      %s32 = sphi 0, %s30
      %s33 = sphi 0, %s31
      %s34 = sphi 0, %s32
      %s35 = sphi 0, %s33
      %s47 = sphi 0, %s49
      %s50 = sphi 0, %s47
      %s51 = sphi 0, %s50
      %s67 = sphi 0, %s51
      %s73 = sphi 0, %s75
      %s76 = sphi 0, %s73
      %s77 = sphi 0, %s76
      %s93 = sphi 0, %s77
      %s99 = sphi 0, %s101
      %s102 = sphi 0, %s99
      %s103 = sphi 0, %s102
      %s119 = sphi 0, %s103
      %s123 = sphi 0, %s123
      %s125 = sphi 0, %s123
      %s126 = sphi 0, %s125
      %s140 = sphi 0, %s126
      %s144 = sphi 0, %s144
      %s146 = sphi 0, %s144
      %s147 = sphi 0, %s146
      %s161 = sphi 0, %s147
      %s165 = sphi 0, %s165
      %s167 = sphi 0, %s165
      %s168 = sphi 0, %s167
      %s182 = sphi 0, %s168
      %s186 = sphi 0, %s186
      %s188 = sphi 0, %s186
      %s189 = sphi 0, %s188
      %s203 = sphi 0, %s189
      %s211 = sphi 0, %s213
      %s214 = sphi 0, %s211
      %s215 = sphi 0, %s214
      %s231 = sphi 0, %s215
    $region4: #{tpu_custom_call.1} parent=1 // loop_header_branch
      %26 = sbr.rel (%p24) target = $region8
    $region5: #{tpu_custom_call.1} parent=1 // loop_body
      %s28 = ssub.s32 %s23, 1
      %s29 = ssub.s32 %s23, 2
      %s36 = sadd.s32 1, %s31
      %p37 = scmp.ge.s32.totalorder %s36, 1
      %s38 = scalar_select %p37, 0, %s36
      %s39 = sadd.s32 1, %s30
      %s40 = scalar_select %p37, %s39, %s30
      %p41 = scmp.ge.s32.totalorder %s40, 2
      %s42 = scalar_select %p41, 0, %s40
      %s43 = ssub.s32 %s30, %s42
      %s44 = ssub.s32 %s31, %s38
      %s45 = sor.u32 %s43, %s44
      %p46 = scmp.eq.s32.totalorder %s45, 0
      %s48 = sadd.s32 %s47, 1
      %s49 = scalar_select %p46, %s47, %s48
      %p52 = pneg %p46
      %p53 = scmp.eq.s32.totalorder %s23, 1
      %p54 = por %p52, %p53
      %p55 = scmp.ne.s32.totalorder %s47, %s50
      %p56 = scmp.eq.s32.totalorder %s23, 0
      %p57 = por %p55, %p56
      %p58 = scmp.ne.s32.totalorder %s47, %s50
      %p59 = scmp.eq.s32.totalorder %s28, 1
      %p60 = por %p58, %p59
      %p61 = scmp.ne.s32.totalorder %s50, %s51
      %p62 = scmp.eq.s32.totalorder %s28, 0
      %p63 = por %p61, %p62
      %p64 = scmp.ne.s32.totalorder %s50, %s51
      %p65 = scmp.eq.s32.totalorder %s29, 1
      %p66 = por %p64, %p65
      %p68 = scmp.ne.s32.totalorder %s51, %s67
      %p69 = scmp.eq.s32.totalorder %s29, 0
      %p70 = por %p68, %p69
      %s71 = ssub.s32 %s30, %s42
      %p72 = scmp.eq.s32.totalorder %s71, 0
      %s74 = sadd.s32 %s73, 1
      %s75 = scalar_select %p72, %s73, %s74
      %p78 = pneg %p72
      %p79 = scmp.eq.s32.totalorder %s23, 1
      %p80 = por %p78, %p79
      %p81 = scmp.ne.s32.totalorder %s73, %s76
      %p82 = scmp.eq.s32.totalorder %s23, 0
      %p83 = por %p81, %p82
      %p84 = scmp.ne.s32.totalorder %s73, %s76
      %p85 = scmp.eq.s32.totalorder %s28, 1
      %p86 = por %p84, %p85
      %p87 = scmp.ne.s32.totalorder %s76, %s77
      %p88 = scmp.eq.s32.totalorder %s28, 0
      %p89 = por %p87, %p88
      %p90 = scmp.ne.s32.totalorder %s76, %s77
      %p91 = scmp.eq.s32.totalorder %s29, 1
      %p92 = por %p90, %p91
      %p94 = scmp.ne.s32.totalorder %s77, %s93
      %p95 = scmp.eq.s32.totalorder %s29, 0
      %p96 = por %p94, %p95
      %s97 = ssub.s32 %s31, %s38
      %p98 = scmp.eq.s32.totalorder %s97, 0
      %s100 = sadd.s32 %s99, 1
      %s101 = scalar_select %p98, %s99, %s100
      %p104 = pneg %p98
      %p105 = scmp.eq.s32.totalorder %s23, 1
      %p106 = por %p104, %p105
      %p107 = scmp.ne.s32.totalorder %s99, %s102
      %p108 = scmp.eq.s32.totalorder %s23, 0
      %p109 = por %p107, %p108
      %p110 = scmp.ne.s32.totalorder %s99, %s102
      %p111 = scmp.eq.s32.totalorder %s28, 1
      %p112 = por %p110, %p111
      %p113 = scmp.ne.s32.totalorder %s102, %s103
      %p114 = scmp.eq.s32.totalorder %s28, 0
      %p115 = por %p113, %p114
      %p116 = scmp.ne.s32.totalorder %s102, %s103
      %p117 = scmp.eq.s32.totalorder %s29, 1
      %p118 = por %p116, %p117
      %p120 = scmp.ne.s32.totalorder %s103, %s119
      %p121 = scmp.eq.s32.totalorder %s29, 0
      %p122 = por %p120, %p121
      %s124 = sadd.s32 %s123, 1
      %p127 = scmp.eq.s32.totalorder %s23, 1
      %p128 = scmp.ne.s32.totalorder %s123, %s125
      %p129 = scmp.eq.s32.totalorder %s23, 0
      %p130 = por %p128, %p129
      %p131 = scmp.ne.s32.totalorder %s123, %s125
      %p132 = scmp.eq.s32.totalorder %s28, 1
      %p133 = por %p131, %p132
      %p134 = scmp.ne.s32.totalorder %s125, %s126
      %p135 = scmp.eq.s32.totalorder %s28, 0
      %p136 = por %p134, %p135
      %p137 = scmp.ne.s32.totalorder %s125, %s126
      %p138 = scmp.eq.s32.totalorder %s29, 1
      %p139 = por %p137, %p138
      %p141 = scmp.ne.s32.totalorder %s126, %s140
      %p142 = scmp.eq.s32.totalorder %s29, 0
      %p143 = por %p141, %p142
      %s145 = sadd.s32 %s144, 1
      %p148 = scmp.eq.s32.totalorder %s23, 1
      %p149 = scmp.ne.s32.totalorder %s144, %s146
      %p150 = scmp.eq.s32.totalorder %s23, 0
      %p151 = por %p149, %p150
      %p152 = scmp.ne.s32.totalorder %s144, %s146
      %p153 = scmp.eq.s32.totalorder %s28, 1
      %p154 = por %p152, %p153
      %p155 = scmp.ne.s32.totalorder %s146, %s147
      %p156 = scmp.eq.s32.totalorder %s28, 0
      %p157 = por %p155, %p156
      %p158 = scmp.ne.s32.totalorder %s146, %s147
      %p159 = scmp.eq.s32.totalorder %s29, 1
      %p160 = por %p158, %p159
      %p162 = scmp.ne.s32.totalorder %s147, %s161
      %p163 = scmp.eq.s32.totalorder %s29, 0
      %p164 = por %p162, %p163
      %s166 = sadd.s32 %s165, 1
      %p169 = scmp.eq.s32.totalorder %s23, 1
      %p170 = scmp.ne.s32.totalorder %s165, %s167
      %p171 = scmp.eq.s32.totalorder %s23, 0
      %p172 = por %p170, %p171
      %p173 = scmp.ne.s32.totalorder %s165, %s167
      %p174 = scmp.eq.s32.totalorder %s28, 1
      %p175 = por %p173, %p174
      %p176 = scmp.ne.s32.totalorder %s167, %s168
      %p177 = scmp.eq.s32.totalorder %s28, 0
      %p178 = por %p176, %p177
      %p179 = scmp.ne.s32.totalorder %s167, %s168
      %p180 = scmp.eq.s32.totalorder %s29, 1
      %p181 = por %p179, %p180
      %p183 = scmp.ne.s32.totalorder %s168, %s182
      %p184 = scmp.eq.s32.totalorder %s29, 0
      %p185 = por %p183, %p184
      %s187 = sadd.s32 %s186, 1
      %p190 = scmp.eq.s32.totalorder %s23, 1
      %p191 = scmp.ne.s32.totalorder %s186, %s188
      %p192 = scmp.eq.s32.totalorder %s23, 0
      %p193 = por %p191, %p192
      %p194 = scmp.ne.s32.totalorder %s186, %s188
      %p195 = scmp.eq.s32.totalorder %s28, 1
      %p196 = por %p194, %p195
      %p197 = scmp.ne.s32.totalorder %s188, %s189
      %p198 = scmp.eq.s32.totalorder %s28, 0
      %p199 = por %p197, %p198
      %p200 = scmp.ne.s32.totalorder %s188, %s189
      %p201 = scmp.eq.s32.totalorder %s29, 1
      %p202 = por %p200, %p201
      %p204 = scmp.ne.s32.totalorder %s189, %s203
      %p205 = scmp.eq.s32.totalorder %s29, 0
      %p206 = por %p204, %p205
      %s207 = ssub.s32 %s30, %s42
      %s208 = ssub.s32 %s31, %s38
      %s209 = sor.u32 %s207, %s208
      %p210 = scmp.eq.s32.totalorder %s209, 0
      %s212 = sadd.s32 %s211, 1
      %s213 = scalar_select %p210, %s211, %s212
      %p216 = pneg %p210
      %p217 = scmp.eq.s32.totalorder %s23, 1
      %p218 = por %p216, %p217
      %p219 = scmp.ne.s32.totalorder %s211, %s214
      %p220 = scmp.eq.s32.totalorder %s23, 0
      %p221 = por %p219, %p220
      %p222 = scmp.ne.s32.totalorder %s211, %s214
      %p223 = scmp.eq.s32.totalorder %s28, 1
      %p224 = por %p222, %p223
      %p225 = scmp.ne.s32.totalorder %s214, %s215
      %p226 = scmp.eq.s32.totalorder %s28, 0
      %p227 = por %p225, %p226
      %p228 = scmp.ne.s32.totalorder %s214, %s215
      %p229 = scmp.eq.s32.totalorder %s29, 1
      %p230 = por %p228, %p229
      %p232 = scmp.ne.s32.totalorder %s215, %s231
      %p233 = scmp.eq.s32.totalorder %s29, 0
      %p234 = por %p232, %p233
      %p235 = scmp.le.s32.totalorder 1, %s23
      %p236 = scmp.lt.s32.totalorder %s23, 3
      %p237 = pnand %p235, %p236
      %p238 = pneg %p237
      // Predicated region
      $region9: #{tpu_custom_call.1} parent=5 // pred_check
        _
      $region10: #{tpu_custom_call.1} parent=5 // pred_check_branch
        %240 = sbr.rel (%p237) target = $region12
      $region11: #{tpu_custom_call.1} parent=5 // pred_region
        %s241 = ssub.s32 %s23, 1
        // Predicated region
        $region13: #{tpu_custom_call.1} parent=11 // pred_check
          %p242 = pneg %p115
        $region14: #{tpu_custom_call.1} parent=11 // pred_check_branch
          %244 = sbr.rel (%p242) target = $region16
        $region15: #{tpu_custom_call.1} parent=11 // pred_region
          %s246 = ssub.s32 128, 128
          %247 = vsyncadd [#allocation6], %s246
          %s248 = smul.addr %s33, 128
          %s249 = scalar_lea.hbm %s2, %s248
          %s251 = sshll.u32 [#allocation7], 4
          %s252 = int_to_ptr.vmem [resolvable:$true] %s251
          %254 = dma.hbm_to_vmem [thread:$0]  %s249, 128, %s252, [#allocation6]
        $region16: #{tpu_custom_call.1} parent=11 // pred_fallthru
          _
        // Predicated region
        $region17: #{tpu_custom_call.1} parent=11 // pred_check
          %p255 = pneg %p136
        $region18: #{tpu_custom_call.1} parent=11 // pred_check_branch
          %257 = sbr.rel (%p255) target = $region20
        $region19: #{tpu_custom_call.1} parent=11 // pred_region
          %s259 = ssub.s32 256, 256
          %260 = vsyncadd [#allocation9], %s259
          %s261 = sshll.u32 [#allocation8], 4
          %s262 = int_to_ptr.vmem [resolvable:$true] %s261
          %267 = dma.hbm_to_vmem [thread:$0]  %s3, 256, %s262, [#allocation9], 64, 64, 4
        $region20: #{tpu_custom_call.1} parent=11 // pred_fallthru
          _
        // Predicated region
        $region21: #{tpu_custom_call.1} parent=11 // pred_check
          %p268 = pneg %p157
        $region22: #{tpu_custom_call.1} parent=11 // pred_check_branch
          %270 = sbr.rel (%p268) target = $region24
        $region23: #{tpu_custom_call.1} parent=11 // pred_region
          _
        $region24: #{tpu_custom_call.1} parent=11 // pred_fallthru
          _
        // Predicated region
        $region25: #{tpu_custom_call.1} parent=11 // pred_check
          %p271 = pneg %p178
        $region26: #{tpu_custom_call.1} parent=11 // pred_check_branch
          %273 = sbr.rel (%p271) target = $region28
        $region27: #{tpu_custom_call.1} parent=11 // pred_region
          _
        $region28: #{tpu_custom_call.1} parent=11 // pred_fallthru
          _
        // Predicated region
        $region29: #{tpu_custom_call.1} parent=11 // pred_check
          %p274 = pneg %p199
        $region30: #{tpu_custom_call.1} parent=11 // pred_check_branch
          %276 = sbr.rel (%p274) target = $region32
        $region31: #{tpu_custom_call.1} parent=11 // pred_region
          _
        $region32: #{tpu_custom_call.1} parent=11 // pred_fallthru
          _
      $region12: #{tpu_custom_call.1} parent=5 // pred_fallthru
        _
      %p277 = scmp.lt.s32.totalorder %s23, 2
      // Predicated region
      $region33: #{tpu_custom_call.1} parent=5 // pred_check
        %p278 = pneg %p277
      $region34: #{tpu_custom_call.1} parent=5 // pred_check_branch
        %280 = sbr.rel (%p278) target = $region36
      $region35: #{tpu_custom_call.1} parent=5 // pred_region
        // Predicated region
        $region37: #{tpu_custom_call.1} parent=35 // pred_check
          %p281 = pneg %p57
        $region38: #{tpu_custom_call.1} parent=35 // pred_check_branch
          %283 = sbr.rel (%p281) target = $region40
        $region39: #{tpu_custom_call.1} parent=35 // pred_region
          %s284 = sand.u32 %s47, 1
          %s285 = scalar_lea.sflag [#allocation3], %s284
          %s286 = sand.u32 %s47, 1
          %s287 = smul.addr %s286, 8
          %s288 = scalar_lea.vmem [#allocation2], %s287
          %s290 = ssub.s32 128, 128
          %291 = vsyncadd %s285, %s290
          %s292 = sadd.s32 %s31, %s30
          %s293 = smul.addr %s292, 128
          %s294 = scalar_lea.hbm %s0, %s293
          %s296 = sshll.u32 %s288, 4
          %s297 = int_to_ptr.vmem [resolvable:$true] %s296
          %299 = dma.hbm_to_vmem [thread:$0]  %s294, 128, %s297, %s285
        $region40: #{tpu_custom_call.1} parent=35 // pred_fallthru
          _
        // Predicated region
        $region41: #{tpu_custom_call.1} parent=35 // pred_check
          %p300 = pneg %p83
        $region42: #{tpu_custom_call.1} parent=35 // pred_check_branch
          %302 = sbr.rel (%p300) target = $region44
        $region43: #{tpu_custom_call.1} parent=35 // pred_region
          %s303 = sand.u32 %s23, 1
          %s304 = scalar_lea.sflag [#allocation6], %s303
          %s305 = sand.u32 %s73, 1
          %s306 = smul.addr %s305, 8
          %s307 = scalar_lea.vmem [#allocation5], %s306
          %s309 = ssub.s32 128, 128
          %310 = vsyncadd %s304, %s309
          %s311 = smul.addr %s30, 128
          %s312 = scalar_lea.hbm %s1, %s311
          %s314 = sshll.u32 %s307, 4
          %s315 = int_to_ptr.vmem [resolvable:$true] %s314
          %317 = dma.hbm_to_vmem [thread:$0]  %s312, 128, %s315, %s304
        $region44: #{tpu_custom_call.1} parent=35 // pred_fallthru
          _
      $region36: #{tpu_custom_call.1} parent=5 // pred_fallthru
        _
      %p318 = scmp.le.s32.totalorder 1, %s23
      %p319 = scmp.lt.s32.totalorder %s23, 3
      %p320 = pnand %p318, %p319
      %p321 = pneg %p320
      // Predicated region
      $region45: #{tpu_custom_call.1} parent=5 // pred_check
        _
      $region46: #{tpu_custom_call.1} parent=5 // pred_check_branch
        %323 = sbr.rel (%p320) target = $region48
      $region47: #{tpu_custom_call.1} parent=5 // pred_region
        %s324 = ssub.s32 %s23, 1
        %s325 = sand.u32 %s50, 1
        %s326 = scalar_lea.sflag [#allocation3], %s325
        %s327 = sand.u32 %s50, 1
        %s328 = smul.addr %s327, 8
        %s329 = scalar_lea.vmem [#allocation2], %s328
        // Predicated region
        $region49: #{tpu_custom_call.1} parent=47 // pred_check
          %p330 = pneg %p63
        $region50: #{tpu_custom_call.1} parent=47 // pred_check_branch
          %332 = sbr.rel (%p330) target = $region52
        $region51: #{tpu_custom_call.1} parent=47 // pred_region
          %333 = dma.done %s326, 128
        $region52: #{tpu_custom_call.1} parent=47 // pred_fallthru
          _
        %s334 = sand.u32 %s28, 1
        %s335 = scalar_lea.sflag [#allocation6], %s334
        %s336 = sand.u32 %s76, 1
        %s337 = smul.addr %s336, 8
        %s338 = scalar_lea.vmem [#allocation5], %s337
        // Predicated region
        $region53: #{tpu_custom_call.1} parent=47 // pred_check
          %p339 = pneg %p89
        $region54: #{tpu_custom_call.1} parent=47 // pred_check_branch
          %341 = sbr.rel (%p339) target = $region56
        $region55: #{tpu_custom_call.1} parent=47 // pred_region
          %342 = dma.done %s335, 128
        $region56: #{tpu_custom_call.1} parent=47 // pred_fallthru
          _
        // Predicated region
        $region57: #{tpu_custom_call.1} parent=47 // pred_check
          %p343 = pneg %p115
        $region58: #{tpu_custom_call.1} parent=47 // pred_check_branch
          %345 = sbr.rel (%p343) target = $region60
        $region59: #{tpu_custom_call.1} parent=47 // pred_region
          %346 = dma.done [#allocation6], 128
        $region60: #{tpu_custom_call.1} parent=47 // pred_fallthru
          _
        // Predicated region
        $region61: #{tpu_custom_call.1} parent=47 // pred_check
          %p347 = pneg %p136
        $region62: #{tpu_custom_call.1} parent=47 // pred_check_branch
          %349 = sbr.rel (%p347) target = $region64
        $region63: #{tpu_custom_call.1} parent=47 // pred_region
          %350 = dma.done [#allocation9], 256
        $region64: #{tpu_custom_call.1} parent=47 // pred_fallthru
          _
        %s351 = sand.u32 %s50, 1
        %s352 = scalar_lea.sflag [#allocation3], %s351
        %s353 = sand.u32 %s50, 1
        %s354 = smul.addr %s353, 8
        %s355 = scalar_lea.vmem [#allocation2], %s354
        %p356 = pneg %p63
        %p357 = pneg %p60
        %s358 = sand.u32 %s28, 1
        %s359 = scalar_lea.sflag [#allocation6], %s358
        %s360 = sand.u32 %s76, 1
        %s361 = smul.addr %s360, 8
        %s362 = scalar_lea.vmem [#allocation5], %s361
        %p363 = pneg %p89
        %p364 = pneg %p86
        %p365 = pneg %p115
        %p366 = pneg %p112
        %p367 = pneg %p136
        %p368 = pneg %p133
        %p369 = pneg %p157
        %p370 = pneg %p154
        %p371 = pneg %p178
        %p372 = pneg %p175
        %p373 = pneg %p199
        %p374 = pneg %p196
        %p375 = pneg %p227
        %p376 = pneg %p224
        %s377 = sand.u32 %s214, 1
        %s378 = scalar_lea.sflag [#allocation4], %s377
        %s379 = sand.u32 %s214, 1
        %s380 = smul.addr %s379, 8
        %s381 = scalar_lea.vmem [#allocation10], %s380
        %v383 = vld [vmem:[#allocation8] sm:$0xf]
        %v384 = vld [vmem:[#allocation8 + $0x4] sm:$0xf]
        %v385 = vld [vmem:[#allocation8 + $0x8] sm:$0xf]
        %v386 = vld [vmem:[#allocation8 + $0xc] sm:$0xf]
        %v387 = vld [vmem:[%s4] sm:$0x1]
        %v388 = vld [vmem:[%s329] sm:$0xff]
        %v389 = vpack.c.bf16 %v388, %v388
        %v391 = vlaneseq
        %v392 = vshrl.u32 %v391, 7
        %v393 = vsub.s32 0, %v392
        %v394 = vrot.slane %v387, %v393
        %v400 = vunpack.c.l.b16 %v383
        %v401 = vunpack.c.l.b16 %v384
        %v402 = vunpack.c.l.b16 %v385
        %v403 = vunpack.c.l.b16 %v386
        %v404 = vpack.c.b16 %v401, %v400
        %v405 = vpack.c.b16 %v403, %v402
        %vm408 = vcmask 261120
        %v410 = vsel %vm408, %v389, 0
        %412 = vmatprep.subr.bf16.mxu0 0
        %413 = vmatpush1.bf16.msra.mxu0 %v404
        %414 = vmatprep.subr.bf16.mxu0 0
        %415 = vmatpush1.bf16.msra.mxu0 %v405
        %416 = vmatprep.subr.bf16.mxu0 0
        %417 = vmatpush1.bf16.msra.mxu0 0
        %418 = vmatprep.subr.bf16.mxu0 0
        %419 = vmatpush1.bf16.msra.mxu0 0
        %420 = vmatprep.subr.bf16.mxu0 0
        %421 = vmatpush1.bf16.msra.mxu0 0
        %422 = vmatprep.subr.bf16.mxu0 0
        %423 = vmatpush1.bf16.msra.mxu0 0
        %424 = vmatprep.subr.bf16.mxu0 0
        %425 = vmatpush1.bf16.msra.mxu0 0
        %426 = vmatprep.subr.bf16.mxu0 0
        %427 = vmatpush1.bf16.msra.mxu0 0
        %428 = vmatprep.subr.bf16.mxu0 0
        %429 = vmatpush1.bf16.msra.mxu0 0
        %430 = vmatprep.subr.bf16.mxu0 0
        %431 = vmatpush1.bf16.msra.mxu0 0
        %432 = vmatprep.subr.bf16.mxu0 0
        %433 = vmatpush1.bf16.msra.mxu0 0
        %434 = vmatprep.subr.bf16.mxu0 0
        %435 = vmatpush1.bf16.msra.mxu0 0
        %436 = vmatprep.subr.bf16.mxu0 0
        %437 = vmatpush1.bf16.msra.mxu0 0
        %438 = vmatprep.subr.bf16.mxu0 0
        %439 = vmatpush1.bf16.msra.mxu0 0
        %440 = vmatprep.subr.bf16.mxu0 0
        %441 = vmatpush1.bf16.msra.mxu0 0
        %442 = vmatprep.subr.bf16.mxu0 0
        %443 = vmatpush1.bf16.msra.mxu0 0
        %444 = vmatprep.mubr.bf16.mxu0 0
        %445 = vmatmul.mubr.bf16.gmra.mrb[0].mxu0 %v410
        %v446 = vpop.f32.mrb[0].mxu0
        %v447 = vadd.f32 %v394, %v446
        %v448 = vpop.f32.mrb[0].mxu0
        %v449 = vpop.f32.mrb[0].mxu0
        %v450 = vpop.f32.mrb[0].mxu0
        %451 = vdwg.mxu0
        %v452 = vld [vmem:[#allocation7] sm:$0xff]
        %v453 = vpack.c.bf16 %v447, %v447
        %455 = vrot.lane.b32.xlu0 %v453, 96
        %v456 = vpop.permute.xlu0 %455
        %vm457 = vcmask 64512
        %v459 = vsel %vm457, %v453, 0
        %v462 = vsel %vm457, %v456, 0
        %464 = vmatprep.subr.bf16.mxu0 0
        %465 = vmatpush1.bf16.xpose.msra.mxu0 %v462
        %466 = vmatprep.subr.bf16.mxu0 0
        %467 = vmatpush1.bf16.xpose.msra.mxu0 0
        %468 = vmatprep.subr.bf16.mxu0 0
        %469 = vmatpush1.bf16.xpose.msra.mxu0 0
        %470 = vmatprep.subr.bf16.mxu0 0
        %471 = vmatpush1.bf16.xpose.msra.mxu0 0
        %472 = vmatprep.subr.bf16.mxu0 0
        %473 = vmatpush1.bf16.xpose.msra.mxu0 0
        %474 = vmatprep.subr.bf16.mxu0 0
        %475 = vmatpush1.bf16.xpose.msra.mxu0 0
        %476 = vmatprep.subr.bf16.mxu0 0
        %477 = vmatpush1.bf16.xpose.msra.mxu0 0
        %478 = vmatprep.subr.bf16.mxu0 0
        %479 = vmatpush1.bf16.xpose.msra.mxu0 0
        %480 = vmatprep.subr.bf16.mxu0 0
        %481 = vmatpush1.bf16.xpose.msra.mxu0 0
        %482 = vmatprep.subr.bf16.mxu0 0
        %483 = vmatpush1.bf16.xpose.msra.mxu0 0
        %484 = vmatprep.subr.bf16.mxu0 0
        %485 = vmatpush1.bf16.xpose.msra.mxu0 0
        %486 = vmatprep.subr.bf16.mxu0 0
        %487 = vmatpush1.bf16.xpose.msra.mxu0 0
        %488 = vmatprep.subr.bf16.mxu0 0
        %489 = vmatpush1.bf16.xpose.msra.mxu0 0
        %490 = vmatprep.subr.bf16.mxu0 0
        %491 = vmatpush1.bf16.xpose.msra.mxu0 0
        %492 = vmatprep.subr.bf16.mxu0 0
        %493 = vmatpush1.bf16.xpose.msra.mxu0 0
        %494 = vmatprep.subr.bf16.mxu0 0
        %495 = vmatpush1.bf16.xpose.msra.mxu0 0
        %496 = vmatprep.mubr.bf16.mxu0 0
        %497 = vmatmul.mubr.bf16.gmra.mrb[0].mxu0 %v459
        %v498 = vpop.f32.mrb[0].mxu0
        %v499 = vadd.f32 0.0, %v498
        %v500 = vpop.f32.mrb[0].mxu0
        %v501 = vpop.f32.mrb[0].mxu0
        %v502 = vpop.f32.mrb[0].mxu0
        %503 = vdwg.mxu0
        %v504 = vmul.f32 %v499, 0.35355338
        %v505 = vadd.f32 %v504, %v452
        %v506 = vsel %vm457, %v505, -inf
        %507 = vmax.xlane.f32.xlu0 %v506
        %v508 = vpop.xlane.xlu0 %507
        %v509 = vsub.f32 %v505, %v508
        %v510 = vmul.f32 %v509, 1.442695
        %v511 = vpow.pop %v510
        %v512 = vsel %vm457, %v511, 0.0
        %513 = vadd.xlane.f32.xlu0 %v512
        %v514 = vpop.xlane.xlu0 %513
        %v515 = vrcp.pop %v514
        %v516 = vmul.f32 %v511, %v515
        %v517 = vpack.c.bf16 %v516, %v516
        %518 = vrot.lane.b32.xlu0 %v453, 64
        %v519 = vpop.permute.xlu0 %518
        %v521 = vsel %vm457, %v517, 0
        %vm523 = vcmask 1043456
        %v525 = vsel %vm523, %v519, 0
        %527 = vmatprep.subr.bf16.mxu0 0
        %528 = vmatpush1.bf16.msra.mxu0 %v525
        %529 = vmatprep.subr.bf16.mxu0 0
        %530 = vmatpush1.bf16.msra.mxu0 0
        %531 = vmatprep.subr.bf16.mxu0 0
        %532 = vmatpush1.bf16.msra.mxu0 0
        %533 = vmatprep.subr.bf16.mxu0 0
        %534 = vmatpush1.bf16.msra.mxu0 0
        %535 = vmatprep.subr.bf16.mxu0 0
        %536 = vmatpush1.bf16.msra.mxu0 0
        %537 = vmatprep.subr.bf16.mxu0 0
        %538 = vmatpush1.bf16.msra.mxu0 0
        %539 = vmatprep.subr.bf16.mxu0 0
        %540 = vmatpush1.bf16.msra.mxu0 0
        %541 = vmatprep.subr.bf16.mxu0 0
        %542 = vmatpush1.bf16.msra.mxu0 0
        %543 = vmatprep.subr.bf16.mxu0 0
        %544 = vmatpush1.bf16.msra.mxu0 0
        %545 = vmatprep.subr.bf16.mxu0 0
        %546 = vmatpush1.bf16.msra.mxu0 0
        %547 = vmatprep.subr.bf16.mxu0 0
        %548 = vmatpush1.bf16.msra.mxu0 0
        %549 = vmatprep.subr.bf16.mxu0 0
        %550 = vmatpush1.bf16.msra.mxu0 0
        %551 = vmatprep.subr.bf16.mxu0 0
        %552 = vmatpush1.bf16.msra.mxu0 0
        %553 = vmatprep.subr.bf16.mxu0 0
        %554 = vmatpush1.bf16.msra.mxu0 0
        %555 = vmatprep.subr.bf16.mxu0 0
        %556 = vmatpush1.bf16.msra.mxu0 0
        %557 = vmatprep.subr.bf16.mxu0 0
        %558 = vmatpush1.bf16.msra.mxu0 0
        %559 = vmatprep.mubr.bf16.mxu0 0
        %560 = vmatmul.mubr.bf16.gmra.mrb[0].mxu0 %v521
        %v561 = vpop.f32.mrb[0].mxu0
        %v562 = vadd.f32 0.0, %v561
        %v563 = vpop.f32.mrb[0].mxu0
        %v564 = vpop.f32.mrb[0].mxu0
        %v565 = vpop.f32.mrb[0].mxu0
        %566 = vdwg.mxu0
        %567 = vrot.lane.b32.xlu0 %v453, 120
        %v568 = vpop.permute.xlu0 %567
        %569 = vrot.lane.b32.xlu0 %v453, 88
        %v570 = vpop.permute.xlu0 %569
        %v572 = vsel %vm457, %v568, 0
        %v575 = vsel %vm457, %v570, 0
        %577 = vmatprep.subr.bf16.mxu0 0
        %578 = vmatpush1.bf16.xpose.msra.mxu0 %v575
        %579 = vmatprep.subr.bf16.mxu0 0
        %580 = vmatpush1.bf16.xpose.msra.mxu0 0
        %581 = vmatprep.subr.bf16.mxu0 0
        %582 = vmatpush1.bf16.xpose.msra.mxu0 0
        %583 = vmatprep.subr.bf16.mxu0 0
        %584 = vmatpush1.bf16.xpose.msra.mxu0 0
        %585 = vmatprep.subr.bf16.mxu0 0
        %586 = vmatpush1.bf16.xpose.msra.mxu0 0
        %587 = vmatprep.subr.bf16.mxu0 0
        %588 = vmatpush1.bf16.xpose.msra.mxu0 0
        %589 = vmatprep.subr.bf16.mxu0 0
        %590 = vmatpush1.bf16.xpose.msra.mxu0 0
        %591 = vmatprep.subr.bf16.mxu0 0
        %592 = vmatpush1.bf16.xpose.msra.mxu0 0
        %593 = vmatprep.subr.bf16.mxu0 0
        %594 = vmatpush1.bf16.xpose.msra.mxu0 0
        %595 = vmatprep.subr.bf16.mxu0 0
        %596 = vmatpush1.bf16.xpose.msra.mxu0 0
        %597 = vmatprep.subr.bf16.mxu0 0
        %598 = vmatpush1.bf16.xpose.msra.mxu0 0
        %599 = vmatprep.subr.bf16.mxu0 0
        %600 = vmatpush1.bf16.xpose.msra.mxu0 0
        %601 = vmatprep.subr.bf16.mxu0 0
        %602 = vmatpush1.bf16.xpose.msra.mxu0 0
        %603 = vmatprep.subr.bf16.mxu0 0
        %604 = vmatpush1.bf16.xpose.msra.mxu0 0
        %605 = vmatprep.subr.bf16.mxu0 0
        %606 = vmatpush1.bf16.xpose.msra.mxu0 0
        %607 = vmatprep.subr.bf16.mxu0 0
        %608 = vmatpush1.bf16.xpose.msra.mxu0 0
        %609 = vmatprep.mubr.bf16.mxu0 0
        %610 = vmatmul.mubr.bf16.gmra.mrb[0].mxu0 %v572
        %v611 = vpop.f32.mrb[0].mxu0
        %v612 = vadd.f32 0.0, %v611
        %v613 = vpop.f32.mrb[0].mxu0
        %v614 = vpop.f32.mrb[0].mxu0
        %v615 = vpop.f32.mrb[0].mxu0
        %616 = vdwg.mxu0
        %v617 = vmul.f32 %v612, 0.35355338
        %v618 = vadd.f32 %v617, %v452
        %v619 = vsel %vm457, %v618, -inf
        %620 = vmax.xlane.f32.xlu0 %v619
        %v621 = vpop.xlane.xlu0 %620
        %v622 = vsub.f32 %v618, %v621
        %v623 = vmul.f32 %v622, 1.442695
        %v624 = vpow.pop %v623
        %v625 = vsel %vm457, %v624, 0.0
        %626 = vadd.xlane.f32.xlu0 %v625
        %v627 = vpop.xlane.xlu0 %626
        %v628 = vrcp.pop %v627
        %v629 = vmul.f32 %v624, %v628
        %v630 = vpack.c.bf16 %v629, %v629
        %631 = vrot.lane.b32.xlu0 %v453, 56
        %v632 = vpop.permute.xlu0 %631
        %v634 = vsel %vm457, %v630, 0
        %v637 = vsel %vm523, %v632, 0
        %639 = vmatprep.subr.bf16.mxu0 0
        %640 = vmatpush1.bf16.msra.mxu0 %v637
        %641 = vmatprep.subr.bf16.mxu0 0
        %642 = vmatpush1.bf16.msra.mxu0 0
        %643 = vmatprep.subr.bf16.mxu0 0
        %644 = vmatpush1.bf16.msra.mxu0 0
        %645 = vmatprep.subr.bf16.mxu0 0
        %646 = vmatpush1.bf16.msra.mxu0 0
        %647 = vmatprep.subr.bf16.mxu0 0
        %648 = vmatpush1.bf16.msra.mxu0 0
        %649 = vmatprep.subr.bf16.mxu0 0
        %650 = vmatpush1.bf16.msra.mxu0 0
        %651 = vmatprep.subr.bf16.mxu0 0
        %652 = vmatpush1.bf16.msra.mxu0 0
        %653 = vmatprep.subr.bf16.mxu0 0
        %654 = vmatpush1.bf16.msra.mxu0 0
        %655 = vmatprep.subr.bf16.mxu0 0
        %656 = vmatpush1.bf16.msra.mxu0 0
        %657 = vmatprep.subr.bf16.mxu0 0
        %658 = vmatpush1.bf16.msra.mxu0 0
        %659 = vmatprep.subr.bf16.mxu0 0
        %660 = vmatpush1.bf16.msra.mxu0 0
        %661 = vmatprep.subr.bf16.mxu0 0
        %662 = vmatpush1.bf16.msra.mxu0 0
        %663 = vmatprep.subr.bf16.mxu0 0
        %664 = vmatpush1.bf16.msra.mxu0 0
        %665 = vmatprep.subr.bf16.mxu0 0
        %666 = vmatpush1.bf16.msra.mxu0 0
        %667 = vmatprep.subr.bf16.mxu0 0
        %668 = vmatpush1.bf16.msra.mxu0 0
        %669 = vmatprep.subr.bf16.mxu0 0
        %670 = vmatpush1.bf16.msra.mxu0 0
        %671 = vmatprep.mubr.bf16.mxu0 0
        %672 = vmatmul.mubr.bf16.gmra.mrb[0].mxu0 %v634
        %v673 = vpop.f32.mrb[0].mxu0
        %v674 = vadd.f32 0.0, %v673
        %v675 = vpop.f32.mrb[0].mxu0
        %v676 = vpop.f32.mrb[0].mxu0
        %v677 = vpop.f32.mrb[0].mxu0
        %678 = vdwg.mxu0
        %679 = vrot.lane.b32.xlu0 %v453, 112
        %v680 = vpop.permute.xlu0 %679
        %681 = vrot.lane.b32.xlu0 %v453, 80
        %v682 = vpop.permute.xlu0 %681
        %v684 = vsel %vm457, %v680, 0
        %v687 = vsel %vm457, %v682, 0
        %689 = vmatprep.subr.bf16.mxu0 0
        %690 = vmatpush1.bf16.xpose.msra.mxu0 %v687
        %691 = vmatprep.subr.bf16.mxu0 0
        %692 = vmatpush1.bf16.xpose.msra.mxu0 0
        %693 = vmatprep.subr.bf16.mxu0 0
        %694 = vmatpush1.bf16.xpose.msra.mxu0 0
        %695 = vmatprep.subr.bf16.mxu0 0
        %696 = vmatpush1.bf16.xpose.msra.mxu0 0
        %697 = vmatprep.subr.bf16.mxu0 0
        %698 = vmatpush1.bf16.xpose.msra.mxu0 0
        %699 = vmatprep.subr.bf16.mxu0 0
        %700 = vmatpush1.bf16.xpose.msra.mxu0 0
        %701 = vmatprep.subr.bf16.mxu0 0
        %702 = vmatpush1.bf16.xpose.msra.mxu0 0
        %703 = vmatprep.subr.bf16.mxu0 0
        %704 = vmatpush1.bf16.xpose.msra.mxu0 0
        %705 = vmatprep.subr.bf16.mxu0 0
        %706 = vmatpush1.bf16.xpose.msra.mxu0 0
        %707 = vmatprep.subr.bf16.mxu0 0
        %708 = vmatpush1.bf16.xpose.msra.mxu0 0
        %709 = vmatprep.subr.bf16.mxu0 0
        %710 = vmatpush1.bf16.xpose.msra.mxu0 0
        %711 = vmatprep.subr.bf16.mxu0 0
        %712 = vmatpush1.bf16.xpose.msra.mxu0 0
        %713 = vmatprep.subr.bf16.mxu0 0
        %714 = vmatpush1.bf16.xpose.msra.mxu0 0
        %715 = vmatprep.subr.bf16.mxu0 0
        %716 = vmatpush1.bf16.xpose.msra.mxu0 0
        %717 = vmatprep.subr.bf16.mxu0 0
        %718 = vmatpush1.bf16.xpose.msra.mxu0 0
        %719 = vmatprep.subr.bf16.mxu0 0
        %720 = vmatpush1.bf16.xpose.msra.mxu0 0
        %721 = vmatprep.mubr.bf16.mxu0 0
        %722 = vmatmul.mubr.bf16.gmra.mrb[0].mxu0 %v684
        %v723 = vpop.f32.mrb[0].mxu0
        %v724 = vadd.f32 0.0, %v723
        %v725 = vpop.f32.mrb[0].mxu0
        %v726 = vpop.f32.mrb[0].mxu0
        %v727 = vpop.f32.mrb[0].mxu0
        %728 = vdwg.mxu0
        %v729 = vmul.f32 %v724, 0.35355338
        %v730 = vadd.f32 %v729, %v452
        %v731 = vsel %vm457, %v730, -inf
        %732 = vmax.xlane.f32.xlu0 %v731
        %v733 = vpop.xlane.xlu0 %732
        %v734 = vsub.f32 %v730, %v733
        %v735 = vmul.f32 %v734, 1.442695
        %v736 = vpow.pop %v735
        %v737 = vsel %vm457, %v736, 0.0
        %738 = vadd.xlane.f32.xlu0 %v737
        %v739 = vpop.xlane.xlu0 %738
        %v740 = vrcp.pop %v739
        %v741 = vmul.f32 %v736, %v740
        %v742 = vpack.c.bf16 %v741, %v741
        %743 = vrot.lane.b32.xlu0 %v453, 48
        %v744 = vpop.permute.xlu0 %743
        %v746 = vsel %vm457, %v742, 0
        %v749 = vsel %vm523, %v744, 0
        %751 = vmatprep.subr.bf16.mxu0 0
        %752 = vmatpush1.bf16.msra.mxu0 %v749
        %753 = vmatprep.subr.bf16.mxu0 0
        %754 = vmatpush1.bf16.msra.mxu0 0
        %755 = vmatprep.subr.bf16.mxu0 0
        %756 = vmatpush1.bf16.msra.mxu0 0
        %757 = vmatprep.subr.bf16.mxu0 0
        %758 = vmatpush1.bf16.msra.mxu0 0
        %759 = vmatprep.subr.bf16.mxu0 0
        %760 = vmatpush1.bf16.msra.mxu0 0
        %761 = vmatprep.subr.bf16.mxu0 0
        %762 = vmatpush1.bf16.msra.mxu0 0
        %763 = vmatprep.subr.bf16.mxu0 0
        %764 = vmatpush1.bf16.msra.mxu0 0
        %765 = vmatprep.subr.bf16.mxu0 0
        %766 = vmatpush1.bf16.msra.mxu0 0
        %767 = vmatprep.subr.bf16.mxu0 0
        %768 = vmatpush1.bf16.msra.mxu0 0
        %769 = vmatprep.subr.bf16.mxu0 0
        %770 = vmatpush1.bf16.msra.mxu0 0
        %771 = vmatprep.subr.bf16.mxu0 0
        %772 = vmatpush1.bf16.msra.mxu0 0
        %773 = vmatprep.subr.bf16.mxu0 0
        %774 = vmatpush1.bf16.msra.mxu0 0
        %775 = vmatprep.subr.bf16.mxu0 0
        %776 = vmatpush1.bf16.msra.mxu0 0
        %777 = vmatprep.subr.bf16.mxu0 0
        %778 = vmatpush1.bf16.msra.mxu0 0
        %779 = vmatprep.subr.bf16.mxu0 0
        %780 = vmatpush1.bf16.msra.mxu0 0
        %781 = vmatprep.subr.bf16.mxu0 0
        %782 = vmatpush1.bf16.msra.mxu0 0
        %783 = vmatprep.mubr.bf16.mxu0 0
        %784 = vmatmul.mubr.bf16.gmra.mrb[0].mxu0 %v746
        %v785 = vpop.f32.mrb[0].mxu0
        %v786 = vadd.f32 0.0, %v785
        %v787 = vpop.f32.mrb[0].mxu0
        %v788 = vpop.f32.mrb[0].mxu0
        %v789 = vpop.f32.mrb[0].mxu0
        %790 = vdwg.mxu0
        %791 = vrot.lane.b32.xlu0 %v453, 104
        %v792 = vpop.permute.xlu0 %791
        %793 = vrot.lane.b32.xlu0 %v453, 72
        %v794 = vpop.permute.xlu0 %793
        %v796 = vsel %vm457, %v792, 0
        %v799 = vsel %vm457, %v794, 0
        %801 = vmatprep.subr.bf16.mxu0 0
        %802 = vmatpush1.bf16.xpose.msra.mxu0 %v799
        %803 = vmatprep.subr.bf16.mxu0 0
        %804 = vmatpush1.bf16.xpose.msra.mxu0 0
        %805 = vmatprep.subr.bf16.mxu0 0
        %806 = vmatpush1.bf16.xpose.msra.mxu0 0
        %807 = vmatprep.subr.bf16.mxu0 0
        %808 = vmatpush1.bf16.xpose.msra.mxu0 0
        %809 = vmatprep.subr.bf16.mxu0 0
        %810 = vmatpush1.bf16.xpose.msra.mxu0 0
        %811 = vmatprep.subr.bf16.mxu0 0
        %812 = vmatpush1.bf16.xpose.msra.mxu0 0
        %813 = vmatprep.subr.bf16.mxu0 0
        %814 = vmatpush1.bf16.xpose.msra.mxu0 0
        %815 = vmatprep.subr.bf16.mxu0 0
        %816 = vmatpush1.bf16.xpose.msra.mxu0 0
        %817 = vmatprep.subr.bf16.mxu0 0
        %818 = vmatpush1.bf16.xpose.msra.mxu0 0
        %819 = vmatprep.subr.bf16.mxu0 0
        %820 = vmatpush1.bf16.xpose.msra.mxu0 0
        %821 = vmatprep.subr.bf16.mxu0 0
        %822 = vmatpush1.bf16.xpose.msra.mxu0 0
        %823 = vmatprep.subr.bf16.mxu0 0
        %824 = vmatpush1.bf16.xpose.msra.mxu0 0
        %825 = vmatprep.subr.bf16.mxu0 0
        %826 = vmatpush1.bf16.xpose.msra.mxu0 0
        %827 = vmatprep.subr.bf16.mxu0 0
        %828 = vmatpush1.bf16.xpose.msra.mxu0 0
        %829 = vmatprep.subr.bf16.mxu0 0
        %830 = vmatpush1.bf16.xpose.msra.mxu0 0
        %831 = vmatprep.subr.bf16.mxu0 0
        %832 = vmatpush1.bf16.xpose.msra.mxu0 0
        %833 = vmatprep.mubr.bf16.mxu0 0
        %834 = vmatmul.mubr.bf16.gmra.mrb[0].mxu0 %v796
        %v835 = vpop.f32.mrb[0].mxu0
        %v836 = vadd.f32 0.0, %v835
        %v837 = vpop.f32.mrb[0].mxu0
        %v838 = vpop.f32.mrb[0].mxu0
        %v839 = vpop.f32.mrb[0].mxu0
        %840 = vdwg.mxu0
        %v841 = vmul.f32 %v836, 0.35355338
        %v842 = vadd.f32 %v841, %v452
        %v843 = vsel %vm457, %v842, -inf
        %844 = vmax.xlane.f32.xlu0 %v843
        %v845 = vpop.xlane.xlu0 %844
        %v846 = vsub.f32 %v842, %v845
        %v847 = vmul.f32 %v846, 1.442695
        %v848 = vpow.pop %v847
        %v849 = vsel %vm457, %v848, 0.0
        %850 = vadd.xlane.f32.xlu0 %v849
        %v851 = vpop.xlane.xlu0 %850
        %v852 = vrcp.pop %v851
        %v853 = vmul.f32 %v848, %v852
        %v854 = vpack.c.bf16 %v853, %v853
        %855 = vrot.lane.b32.xlu0 %v453, 40
        %v856 = vpop.permute.xlu0 %855
        %v858 = vsel %vm457, %v854, 0
        %v861 = vsel %vm523, %v856, 0
        %863 = vmatprep.subr.bf16.mxu0 0
        %864 = vmatpush1.bf16.msra.mxu0 %v861
        %865 = vmatprep.subr.bf16.mxu0 0
        %866 = vmatpush1.bf16.msra.mxu0 0
        %867 = vmatprep.subr.bf16.mxu0 0
        %868 = vmatpush1.bf16.msra.mxu0 0
        %869 = vmatprep.subr.bf16.mxu0 0
        %870 = vmatpush1.bf16.msra.mxu0 0
        %871 = vmatprep.subr.bf16.mxu0 0
        %872 = vmatpush1.bf16.msra.mxu0 0
        %873 = vmatprep.subr.bf16.mxu0 0
        %874 = vmatpush1.bf16.msra.mxu0 0
        %875 = vmatprep.subr.bf16.mxu0 0
        %876 = vmatpush1.bf16.msra.mxu0 0
        %877 = vmatprep.subr.bf16.mxu0 0
        %878 = vmatpush1.bf16.msra.mxu0 0
        %879 = vmatprep.subr.bf16.mxu0 0
        %880 = vmatpush1.bf16.msra.mxu0 0
        %881 = vmatprep.subr.bf16.mxu0 0
        %882 = vmatpush1.bf16.msra.mxu0 0
        %883 = vmatprep.subr.bf16.mxu0 0
        %884 = vmatpush1.bf16.msra.mxu0 0
        %885 = vmatprep.subr.bf16.mxu0 0
        %886 = vmatpush1.bf16.msra.mxu0 0
        %887 = vmatprep.subr.bf16.mxu0 0
        %888 = vmatpush1.bf16.msra.mxu0 0
        %889 = vmatprep.subr.bf16.mxu0 0
        %890 = vmatpush1.bf16.msra.mxu0 0
        %891 = vmatprep.subr.bf16.mxu0 0
        %892 = vmatpush1.bf16.msra.mxu0 0
        %893 = vmatprep.subr.bf16.mxu0 0
        %894 = vmatpush1.bf16.msra.mxu0 0
        %895 = vmatprep.mubr.bf16.mxu0 0
        %896 = vmatmul.mubr.bf16.gmra.mrb[0].mxu0 %v858
        %v897 = vpop.f32.mrb[0].mxu0
        %v898 = vadd.f32 0.0, %v897
        %v899 = vpop.f32.mrb[0].mxu0
        %v900 = vpop.f32.mrb[0].mxu0
        %v901 = vpop.f32.mrb[0].mxu0
        %902 = vdwg.mxu0
        %904 = vrot.lane.b32.xlu0 %v674, 8
        %v905 = vpop.permute.xlu0 %904
        %908 = vrot.lane.b32.xlu0 %v786, 16
        %v909 = vpop.permute.xlu0 %908
        %912 = vrot.lane.b32.xlu0 %v898, 24
        %v913 = vpop.permute.xlu0 %912
        %v915 = vsel %vm457, %v562, %v905
        %vm916 = vcmask 130048
        %v917 = vsel %vm916, %v915, %v909
        %vm918 = vcmask 195584
        %v919 = vsel %vm918, %v917, %v913
        %v920 = vpack.c.bf16 %v919, %v919
        %v921 = vld [vmem:[%s5] sm:$0xf]
        %v922 = vld [vmem:[%s5 + $0x4] sm:$0xf]
        %v923 = vld [vmem:[%s5 + $0x8] sm:$0xf]
        %v924 = vld [vmem:[%s5 + $0xc] sm:$0xf]
        %v925 = vld [vmem:[%s6] sm:$0x1]
        %v927 = vlaneseq
        %v928 = vshrl.u32 %v927, 7
        %v929 = vsub.s32 0, %v928
        %v930 = vrot.slane %v925, %v929
        %v936 = vunpack.c.l.b16 %v921
        %v937 = vunpack.c.l.b16 %v922
        %v938 = vunpack.c.l.b16 %v923
        %v939 = vunpack.c.l.b16 %v924
        %v940 = vpack.c.b16 %v937, %v936
        %v941 = vpack.c.b16 %v939, %v938
        %v945 = vsel %vm408, %v920, 0
        %947 = vmatprep.subr.bf16.mxu0 0
        %948 = vmatpush1.bf16.msra.mxu0 %v940
        %949 = vmatprep.subr.bf16.mxu0 0
        %950 = vmatpush1.bf16.msra.mxu0 %v941
        %951 = vmatprep.subr.bf16.mxu0 0
        %952 = vmatpush1.bf16.msra.mxu0 0
        %953 = vmatprep.subr.bf16.mxu0 0
        %954 = vmatpush1.bf16.msra.mxu0 0
        %955 = vmatprep.subr.bf16.mxu0 0
        %956 = vmatpush1.bf16.msra.mxu0 0
        %957 = vmatprep.subr.bf16.mxu0 0
        %958 = vmatpush1.bf16.msra.mxu0 0
        %959 = vmatprep.subr.bf16.mxu0 0
        %960 = vmatpush1.bf16.msra.mxu0 0
        %961 = vmatprep.subr.bf16.mxu0 0
        %962 = vmatpush1.bf16.msra.mxu0 0
        %963 = vmatprep.subr.bf16.mxu0 0
        %964 = vmatpush1.bf16.msra.mxu0 0
        %965 = vmatprep.subr.bf16.mxu0 0
        %966 = vmatpush1.bf16.msra.mxu0 0
        %967 = vmatprep.subr.bf16.mxu0 0
        %968 = vmatpush1.bf16.msra.mxu0 0
        %969 = vmatprep.subr.bf16.mxu0 0
        %970 = vmatpush1.bf16.msra.mxu0 0
        %971 = vmatprep.subr.bf16.mxu0 0
        %972 = vmatpush1.bf16.msra.mxu0 0
        %973 = vmatprep.subr.bf16.mxu0 0
        %974 = vmatpush1.bf16.msra.mxu0 0
        %975 = vmatprep.subr.bf16.mxu0 0
        %976 = vmatpush1.bf16.msra.mxu0 0
        %977 = vmatprep.subr.bf16.mxu0 0
        %978 = vmatpush1.bf16.msra.mxu0 0
        %979 = vmatprep.mubr.bf16.mxu0 0
        %980 = vmatmul.mubr.bf16.gmra.mrb[0].mxu0 %v945
        %v981 = vpop.f32.mrb[0].mxu0
        %v982 = vadd.f32 %v930, %v981
        %v983 = vpop.f32.mrb[0].mxu0
        %v984 = vpop.f32.mrb[0].mxu0
        %v985 = vpop.f32.mrb[0].mxu0
        %986 = vdwg.mxu0
        %987 = vst.msk [vmem:[%s381] sm:$0xff] %vm408, %v982
        %s988 = sand.u32 %s214, 1
        %s989 = scalar_lea.sflag [#allocation4], %s988
        %s990 = sand.u32 %s214, 1
        %s991 = smul.addr %s990, 8
        %s992 = scalar_lea.vmem [#allocation10], %s991
        // Predicated region
        $region65: #{tpu_custom_call.1} parent=47 // pred_check
          %p993 = pneg %p224
        $region66: #{tpu_custom_call.1} parent=47 // pred_check_branch
          %995 = sbr.rel (%p993) target = $region68
        $region67: #{tpu_custom_call.1} parent=47 // pred_region
          %s997 = ssub.s32 128, 128
          %998 = vsyncadd %s989, %s997
          %s999 = sadd.s32 %s33, %s32
          %s1000 = smul.addr %s999, 128
          %s1001 = scalar_lea.hbm %s7, %s1000
          %s1003 = sshll.u32 %s992, 4
          %s1004 = int_to_ptr.vmem [resolvable:$true] %s1003
          %1006 = dma.vmem_to_hbm [thread:$0]  %s1004, 128, %s1001, %s989
        $region68: #{tpu_custom_call.1} parent=47 // pred_fallthru
          _
      $region48: #{tpu_custom_call.1} parent=5 // pred_fallthru
        _
      %p1007 = scmp.le.s32.totalorder 2, %s23
      // Predicated region
      $region69: #{tpu_custom_call.1} parent=5 // pred_check
        %p1008 = pneg %p1007
      $region70: #{tpu_custom_call.1} parent=5 // pred_check_branch
        %1010 = sbr.rel (%p1008) target = $region72
      $region71: #{tpu_custom_call.1} parent=5 // pred_region
        %s1011 = ssub.s32 %s23, 2
        // Predicated region
        $region73: #{tpu_custom_call.1} parent=71 // pred_check
          %p1012 = pneg %p230
        $region74: #{tpu_custom_call.1} parent=71 // pred_check_branch
          %1014 = sbr.rel (%p1012) target = $region76
        $region75: #{tpu_custom_call.1} parent=71 // pred_region
          %s1015 = sand.u32 %s215, 1
          %s1016 = scalar_lea.sflag [#allocation4], %s1015
          %s1017 = sand.u32 %s215, 1
          %s1018 = smul.addr %s1017, 8
          %s1019 = scalar_lea.vmem [#allocation10], %s1018
          %1020 = dma.done %s1016, 128
        $region76: #{tpu_custom_call.1} parent=71 // pred_fallthru
          _
      $region72: #{tpu_custom_call.1} parent=5 // pred_fallthru
        _
    $region6: #{tpu_custom_call.1} parent=1 // loop_footer
      %s27 = sadd.s32 1, %s23
    $region7: #{tpu_custom_call.1} parent=1 // loop_footer_branch
      %22 = sbr.rel target = $region3
    $region8: #{tpu_custom_call.1} parent=1 // loop_exit
      _
    %1021 = vsyncpa [#allocation3], 1
    %s1022 = scalar_lea.sflag [#allocation3], 1
    %1023 = vsyncpa %s1022, 1
    %1024 = vsyncpa [#allocation6], 1
    %s1025 = scalar_lea.sflag [#allocation6], 1
    %1026 = vsyncpa %s1025, 1
    %1027 = vsyncpa [#allocation9], 1
    %1028 = vsyncpa [#allocation4], 1
    %s1029 = scalar_lea.sflag [#allocation4], 1
    %1030 = vsyncpa %s1029, 1

</llo_original>
